<compile_context>
chip_gen: v5e
topology: v5e:2x2
jax: 0.10.0
libtpu: 0.0.40
codegen_flags: <defaults>
</compile_context>

<pallas_src>
import numpy as np
import jax
import jax.numpy as jnp
from jax.experimental import pallas as pl
from jax.experimental.pallas import tpu as pltpu


def _round_up(x, m):
    return ((x + m - 1) // m) * m


# ----------------------------------------------------------------------------- kernel 1
def tke_kernel(u_ref, o_ref):
    # u_ref: (1, C, TS, 128) f32 ; o_ref: (1, TS, 128) f32
    u = u_ref[...]
    C = u.shape[1]
    acc = u[:, 0] * u[:, 0]
    for c in range(1, C):                      # unrolled VPU accumulate over small static C
        acc = acc + u[:, c] * u[:, c]
    o_ref[...] = 0.5 * acc


# ----------------------------------------------------------------------------- kernel 2
def spectrum_kernel(logp_ref, cw_ref, w_ref, scale_ref, o_ref):
    # logp_ref : (TB, 8, K, n)  log|fft(tke)|^2 gathered at the 8 trilinear corners
    # cw_ref   : (1, 8, K, n)   trilinear corner weights (batch independent)
    # w_ref    : (1, 1, n)      Lebedev quadrature weights
    # scale_ref: (1, K)         4 * pi * k^2
    # o_ref    : (TB, K)
    lp = logp_ref[...]
    cw = cw_ref[...]
    acc = cw[:, 0] * lp[:, 0]
    for c in range(1, 8):                      # unrolled VALU accumulate over leading corner axis
        acc = acc + cw[:, c] * lp[:, c]
    vals = jnp.exp(acc)                        # (TB, K, n) -- EUP
    ek = jnp.sum(vals * w_ref[...], axis=-1)   # lane reduce over n (tiny vs. the VALU work above)
    o_ref[...] = ek * scale_ref[...]           # (TB, K), lane-dense store, no reshape


# ----------------------------------------------------------------------------- glue
def _corner_tables(points, grid_shape):
    """Flat corner indices (8, Q) int32 and trilinear weights (8, Q) f32.

    Mirrors torch interp3 semantics exactly: corner indices are clamped per-dim,
    and the fractional weights use the *clamped* floor (points - clamp(floor(points))).
    """
    X, Y, Z = grid_shape
    ub = jnp.array([X - 1, Y - 1, Z - 1], dtype=jnp.int32)
    p0f = jnp.floor(points)
    p0 = jnp.clip(p0f.astype(jnp.int32), 0, ub)
    p1 = jnp.clip(p0f.astype(jnp.int32) + 1, 0, ub)
    w = points - p0.astype(points.dtype)
    wx, wy, wz = w[:, 0], w[:, 1], w[:, 2]
    x0, y0, z0 = p0[:, 0], p0[:, 1], p0[:, 2]
    x1, y1, z1 = p1[:, 0], p1[:, 1], p1[:, 2]
    corners = [
        (x0, y0, z0, (1 - wx) * (1 - wy) * (1 - wz)),
        (x0, y0, z1, (1 - wx) * (1 - wy) * wz),
        (x0, y1, z0, (1 - wx) * wy * (1 - wz)),
        (x0, y1, z1, (1 - wx) * wy * wz),
        (x1, y0, z0, wx * (1 - wy) * (1 - wz)),
        (x1, y0, z1, wx * (1 - wy) * wz),
        (x1, y1, z0, wx * wy * (1 - wz)),
        (x1, y1, z1, wx * wy * wz),
    ]
    idx = jnp.stack([(xi * Y + yi) * Z + zi for xi, yi, zi, _ in corners], axis=0)  # (8, Q)
    cw = jnp.stack([wc for *_, wc in corners], axis=0)                              # (8, Q)
    return idx.astype(jnp.int32), cw.astype(jnp.float32)


@jax.jit
def tke_spectrum(u, k, p, w):
    """Pallas implementation of TurbulentKineticEnergySpectrum.forward.

    u: (B, C, X, Y, Z) f32, k: (K,) f32, p: (n, 3) f32, w: (n,) f32 -> (B, K) f32
    """
    B, C, X, Y, Z = u.shape
    V = X * Y * Z
    K = k.shape[0]
    n = p.shape[0]

    # --- kernel 1: turbulent kinetic energy, lane-dense (S, 128) spatial layout
    S_raw = _round_up(V, 128) // 128
    TS = min(512, _round_up(S_raw, 8))       # sublane tile (multiple of 8), <= 512
    S = _round_up(S_raw, TS)
    Vp = S * 128

    u_flat = u.reshape(B, C, V).astype(jnp.float32)   # contiguous reshape, no transpose copy
    if Vp != V:
        u_flat = jnp.pad(u_flat, ((0, 0), (0, 0), (0, Vp - V)))
    u_r = u_flat.reshape(B, C, S, 128)

    tke_r = pl.pallas_call(
        tke_kernel,
        out_shape=jax.ShapeDtypeStruct((B, S, 128), jnp.float32),
        grid=(B, S // TS),
        in_specs=[pl.BlockSpec((1, C, TS, 128), lambda b, s: (b, 0, s, 0))],
        out_specs=pl.BlockSpec((1, TS, 128), lambda b, s: (b, s, 0)),
        compiler_params=pltpu.CompilerParams(
            dimension_semantics=("parallel", "parallel")),
    )(u_r)
    tke = tke_r.reshape(B, Vp)[:, :V].reshape(B, X, Y, Z)

    # TODO(synk): FFT has no Pallas/Mosaic primitive; fftn + fftshift stay in plain JAX.
    tke_fft = jnp.fft.fftshift(jnp.fft.fftn(tke, axes=(-3, -2, -1)), axes=(-3, -2, -1))
    power = jnp.real(tke_fft) ** 2 + jnp.imag(tke_fft) ** 2
    # Guard log(0) -> -inf so a zero corner weight can never produce 0 * (-inf) = NaN.
    logp_flat = jnp.log(jnp.maximum(power, jnp.finfo(jnp.float32).tiny)
                        ).reshape(B, V).astype(jnp.float32)

    # --- query points & corner tables (tiny: K*n*8 entries) ------------------
    center = jnp.array([X // 2, Y // 2, Z // 2], dtype=jnp.float32)
    p_query = (k[:, None, None] * p[None] + center).reshape(K * n, 3).astype(jnp.float32)
    idx8, cw8 = _corner_tables(p_query, (X, Y, Z))        # (8, K*n) each
    idx_8kn = idx8.reshape(8, K, n)                        # corner axis leading
    cw_8kn = cw8.reshape(1, 8, K, n)

    # TODO(synk): arbitrary flat-index gather from a full-V slab has no robust in-kernel
    # Pallas TPU lowering; the 8-corner gather stays in XLA glue (one gathered tensor,
    # since log-power is computed on the full grid above).
    logp_g = jnp.take(logp_flat, idx_8kn.reshape(-1), axis=1, mode="clip"
                      ).reshape(B, 8, K, n)

    w_row = w.astype(jnp.float32).reshape(1, 1, n)
    scale = (4.0 * jnp.pi * k.astype(jnp.float32) ** 2).reshape(1, K)

    # --- kernel 2: trilinear interp -> exp -> quadrature -> E(k) -------------
    TB = 8 if (B % 8 == 0) else B             # fold batch; 8-row blocks when B is large
    ek = pl.pallas_call(
        spectrum_kernel,
        out_shape=jax.ShapeDtypeStruct((B, K), jnp.float32),
        grid=(B // TB,),
        in_specs=[
            pl.BlockSpec((TB, 8, K, n), lambda b: (b, 0, 0, 0)),
            pl.BlockSpec((1, 8, K, n), lambda b: (0, 0, 0, 0)),
            pl.BlockSpec((1, 1, n), lambda b: (0, 0, 0)),
            pl.BlockSpec((1, K), lambda b: (0, 0)),
        ],
        out_specs=pl.BlockSpec((TB, K), lambda b: (b, 0)),
        compiler_params=pltpu.CompilerParams(dimension_semantics=("parallel",)),
    )(logp_g, cw_8kn, w_row, scale)
    return ek


# ----------------------------------------------------------------------------- reference
def _interp3_ref(grid, points, dims):
    ub = jnp.array([d - 1 for d in dims], dtype=jnp.int32)
    p0f = jnp.floor(points)
    p0 = jnp.clip(p0f.astype(jnp.int32), 0, ub)
    p1 = jnp.clip(p0f.astype(jnp.int32) + 1, 0, ub)
    w = points - p0.astype(points.dtype)
    wx, wy, wz = w[..., 0], w[..., 1], w[..., 2]
    x0, y0, z0 = p0[..., 0], p0[..., 1], p0[..., 2]
    x1, y1, z1 = p1[..., 0], p1[..., 1], p1[..., 2]
    return ((1 - wx) * (1 - wy) * (1 - wz) * grid[..., x0, y0, z0]
            + (1 - wx) * (1 - wy) * wz * grid[..., x0, y0, z1]
            + (1 - wx) * wy * (1 - wz) * grid[..., x0, y1, z0]
            + (1 - wx) * wy * wz * grid[..., x0, y1, z1]
            + wx * (1 - wy) * (1 - wz) * grid[..., x1, y0, z0]
            + wx * (1 - wy) * wz * grid[..., x1, y0, z1]
            + wx * wy * (1 - wz) * grid[..., x1, y1, z0]
            + wx * wy * wz * grid[..., x1, y1, z1])


def tke_spectrum_ref(u, k, p, w):
    tke = 0.5 * jnp.sum(u ** 2, axis=-4)
    f = jnp.fft.fftshift(jnp.fft.fftn(tke, axes=(-3, -2, -1)), axes=(-3, -2, -1))
    grid = jnp.log(jnp.abs(f) ** 2)
    center = jnp.array([s // 2 for s in u.shape[-3:]], dtype=jnp.float32)
    pts = k[:, None, None] * p + center
    vals = jnp.exp(_interp3_ref(grid, pts, u.shape[-3:])).astype(jnp.float32)
    return jnp.matmul(vals, w) * (4.0 * jnp.pi * k ** 2)


# ----------------------------------------------------------------------------- main
if __name__ == "__main__":
    key = jax.random.PRNGKey(0)
    ku, kp = jax.random.split(key, 2)

    B, C, X, Y, Z = 2, 3, 16, 16, 16
    n_quad = 128                          # synthetic Lebedev-like quadrature size
    K = 4

    u = jax.random.normal(ku, (B, C, X, Y, Z), dtype=jnp.float32)
    k = jnp.array([1.0, 2.0, 3.0, 4.0], dtype=jnp.float32)

    # deterministic synthetic quadrature: unit-sphere points + uniform weights
    raw = jax.random.normal(kp, (n_quad, 3), dtype=jnp.float32)
    p = raw / jnp.linalg.norm(raw, axis=-1, keepdims=True)
    w = jnp.full((n_quad,), 1.0 / n_quad, dtype=jnp.float32)

    E_k = jax.block_until_ready(tke_spectrum(u, k, p, w))
    E_ref = jax.block_until_ready(tke_spectrum_ref(u, k, p, w))

    assert E_k.shape == (B, K), E_k.shape
    assert np.all(np.isfinite(np.asarray(E_k)))
    np.testing.assert_allclose(np.asarray(E_k), np.asarray(E_ref), rtol=2e-2)

    print("KERNEL_OK")
</pallas_src>

<mosaic_0001>
module attributes {stable_mosaic.version = 11 : i64} {
  func.func @tke_kernel(%arg0: i32, %arg1: i32, %arg2: memref<1x3x32x128xf32, #tpu.memory_space<vmem>>, %arg3: memref<1x32x128xf32, #tpu.memory_space<vmem>>) attributes {dimension_semantics = [#tpu.dimension_semantics<parallel>, #tpu.dimension_semantics<parallel>], iteration_bounds = array<i64: 2, 1>, scalar_prefetch = 0 : i64, scratch_operands = 0 : i64, tpu.core_type = #tpu.core_type<tc>, window_params = [{transform_indices = @transform_0, window_bounds = array<i64: 1, 3, 32, 128>}, {transform_indices = @transform_1, window_bounds = array<i64: 1, 32, 128>}]} {
    %c0 = arith.constant 0 : index
    %c0_0 = arith.constant 0 : index
    %c0_1 = arith.constant 0 : index
    %c0_2 = arith.constant 0 : index
    %0 = vector.load %arg2[%c0, %c0_0, %c0_1, %c0_2] : memref<1x3x32x128xf32, #tpu.memory_space<vmem>>, vector<1x3x32x128xf32>
    %1 = vector.extract_strided_slice %0 {offsets = [0, 0, 0, 0], sizes = [1, 1, 32, 128], strides = [1, 1, 1, 1]} : vector<1x3x32x128xf32> to vector<1x1x32x128xf32>
    %2 = vector.shape_cast %1 : vector<1x1x32x128xf32> to vector<1x32x128xf32>
    %3 = vector.extract_strided_slice %0 {offsets = [0, 0, 0, 0], sizes = [1, 1, 32, 128], strides = [1, 1, 1, 1]} : vector<1x3x32x128xf32> to vector<1x1x32x128xf32>
    %4 = vector.shape_cast %3 : vector<1x1x32x128xf32> to vector<1x32x128xf32>
    %5 = arith.mulf %2, %4 : vector<1x32x128xf32>
    %6 = vector.extract_strided_slice %0 {offsets = [0, 1, 0, 0], sizes = [1, 1, 32, 128], strides = [1, 1, 1, 1]} : vector<1x3x32x128xf32> to vector<1x1x32x128xf32>
    %7 = vector.shape_cast %6 : vector<1x1x32x128xf32> to vector<1x32x128xf32>
    %8 = vector.extract_strided_slice %0 {offsets = [0, 1, 0, 0], sizes = [1, 1, 32, 128], strides = [1, 1, 1, 1]} : vector<1x3x32x128xf32> to vector<1x1x32x128xf32>
    %9 = vector.shape_cast %8 : vector<1x1x32x128xf32> to vector<1x32x128xf32>
    %10 = arith.mulf %7, %9 : vector<1x32x128xf32>
    %11 = arith.addf %5, %10 : vector<1x32x128xf32>
    %12 = vector.extract_strided_slice %0 {offsets = [0, 2, 0, 0], sizes = [1, 1, 32, 128], strides = [1, 1, 1, 1]} : vector<1x3x32x128xf32> to vector<1x1x32x128xf32>
    %13 = vector.shape_cast %12 : vector<1x1x32x128xf32> to vector<1x32x128xf32>
    %14 = vector.extract_strided_slice %0 {offsets = [0, 2, 0, 0], sizes = [1, 1, 32, 128], strides = [1, 1, 1, 1]} : vector<1x3x32x128xf32> to vector<1x1x32x128xf32>
    %15 = vector.shape_cast %14 : vector<1x1x32x128xf32> to vector<1x32x128xf32>
    %16 = arith.mulf %13, %15 : vector<1x32x128xf32>
    %17 = arith.addf %11, %16 : vector<1x32x128xf32>
    %cst = arith.constant 5.000000e-01 : f32
    %18 = vector.broadcast %cst : f32 to vector<1x32x128xf32>
    %19 = arith.mulf %18, %17 : vector<1x32x128xf32>
    %c0_3 = arith.constant 0 : index
    %c0_4 = arith.constant 0 : index
    %c0_5 = arith.constant 0 : index
    %20 = vector.load %arg3[%c0_3, %c0_4, %c0_5] : memref<1x32x128xf32, #tpu.memory_space<vmem>>, vector<1x32x128xf32>
    tpu.vector_store %arg3[%c0_3, %c0_4, %c0_5], %19 {strides = array<i32>} : memref<1x32x128xf32, #tpu.memory_space<vmem>>, vector<1x32x128xf32>,
    return
  }
  func.func @transform_0(%arg0: i32, %arg1: i32) -> (i32, i32, i32, i32) {
    %c0_i32 = arith.constant 0 : i32
    %c0_i32_0 = arith.constant 0 : i32
    %c0_i32_1 = arith.constant 0 : i32
    return %arg0, %c0_i32, %arg1, %c0_i32_0 : i32, i32, i32, i32
  }
  func.func @transform_1(%arg0: i32, %arg1: i32) -> (i32, i32, i32) {
    %c0_i32 = arith.constant 0 : i32
    %c0_i32_0 = arith.constant 0 : i32
    return %arg0, %arg1, %c0_i32 : i32, i32, i32
  }
}

module attributes {stable_mosaic.version = 11 : i64} {
  func.func @spectrum_kernel(%arg0: i32, %arg1: memref<2x8x4x128xf32, #tpu.memory_space<vmem>>, %arg2: memref<1x8x4x128xf32, #tpu.memory_space<vmem>>, %arg3: memref<1x1x128xf32, #tpu.memory_space<vmem>>, %arg4: memref<1x4xf32, #tpu.memory_space<vmem>>, %arg5: memref<2x4xf32, #tpu.memory_space<vmem>>) attributes {dimension_semantics = [#tpu.dimension_semantics<parallel>], iteration_bounds = array<i64: 1>, scalar_prefetch = 0 : i64, scratch_operands = 0 : i64, tpu.core_type = #tpu.core_type<tc>, window_params = [{transform_indices = @transform_0, window_bounds = array<i64: 2, 8, 4, 128>}, {pipeline_mode = #tpu.pipeline_mode<synchronous>, transform_indices = @transform_1, window_bounds = array<i64: 1, 8, 4, 128>}, {pipeline_mode = #tpu.pipeline_mode<synchronous>, transform_indices = @transform_2, window_bounds = array<i64: 1, 1, 128>}, {pipeline_mode = #tpu.pipeline_mode<synchronous>, transform_indices = @transform_3, window_bounds = array<i64: 1, 4>}, {transform_indices = @transform_4, window_bounds = array<i64: 2, 4>}]} {
    %c0 = arith.constant 0 : index
    %c0_0 = arith.constant 0 : index
    %c0_1 = arith.constant 0 : index
    %c0_2 = arith.constant 0 : index
    %0 = vector.load %arg1[%c0, %c0_0, %c0_1, %c0_2] : memref<2x8x4x128xf32, #tpu.memory_space<vmem>>, vector<2x8x4x128xf32>
    %c0_3 = arith.constant 0 : index
    %c0_4 = arith.constant 0 : index
    %c0_5 = arith.constant 0 : index
    %c0_6 = arith.constant 0 : index
    %1 = vector.load %arg2[%c0_3, %c0_4, %c0_5, %c0_6] : memref<1x8x4x128xf32, #tpu.memory_space<vmem>>, vector<1x8x4x128xf32>
    %2 = vector.extract_strided_slice %1 {offsets = [0, 0, 0, 0], sizes = [1, 1, 4, 128], strides = [1, 1, 1, 1]} : vector<1x8x4x128xf32> to vector<1x1x4x128xf32>
    %3 = vector.shape_cast %2 : vector<1x1x4x128xf32> to vector<1x4x128xf32>
    %4 = vector.extract_strided_slice %0 {offsets = [0, 0, 0, 0], sizes = [2, 1, 4, 128], strides = [1, 1, 1, 1]} : vector<2x8x4x128xf32> to vector<2x1x4x128xf32>
    %5 = vector.shape_cast %4 : vector<2x1x4x128xf32> to vector<2x4x128xf32>
    %6 = vector.broadcast %3 : vector<1x4x128xf32> to vector<2x4x128xf32>
    %7 = arith.mulf %6, %5 : vector<2x4x128xf32>
    %8 = vector.extract_strided_slice %1 {offsets = [0, 1, 0, 0], sizes = [1, 1, 4, 128], strides = [1, 1, 1, 1]} : vector<1x8x4x128xf32> to vector<1x1x4x128xf32>
    %9 = vector.shape_cast %8 : vector<1x1x4x128xf32> to vector<1x4x128xf32>
    %10 = vector.extract_strided_slice %0 {offsets = [0, 1, 0, 0], sizes = [2, 1, 4, 128], strides = [1, 1, 1, 1]} : vector<2x8x4x128xf32> to vector<2x1x4x128xf32>
    %11 = vector.shape_cast %10 : vector<2x1x4x128xf32> to vector<2x4x128xf32>
    %12 = vector.broadcast %9 : vector<1x4x128xf32> to vector<2x4x128xf32>
    %13 = arith.mulf %12, %11 : vector<2x4x128xf32>
    %14 = arith.addf %7, %13 : vector<2x4x128xf32>
    %15 = vector.extract_strided_slice %1 {offsets = [0, 2, 0, 0], sizes = [1, 1, 4, 128], strides = [1, 1, 1, 1]} : vector<1x8x4x128xf32> to vector<1x1x4x128xf32>
    %16 = vector.shape_cast %15 : vector<1x1x4x128xf32> to vector<1x4x128xf32>
    %17 = vector.extract_strided_slice %0 {offsets = [0, 2, 0, 0], sizes = [2, 1, 4, 128], strides = [1, 1, 1, 1]} : vector<2x8x4x128xf32> to vector<2x1x4x128xf32>
    %18 = vector.shape_cast %17 : vector<2x1x4x128xf32> to vector<2x4x128xf32>
    %19 = vector.broadcast %16 : vector<1x4x128xf32> to vector<2x4x128xf32>
    %20 = arith.mulf %19, %18 : vector<2x4x128xf32>
    %21 = arith.addf %14, %20 : vector<2x4x128xf32>
    %22 = vector.extract_strided_slice %1 {offsets = [0, 3, 0, 0], sizes = [1, 1, 4, 128], strides = [1, 1, 1, 1]} : vector<1x8x4x128xf32> to vector<1x1x4x128xf32>
    %23 = vector.shape_cast %22 : vector<1x1x4x128xf32> to vector<1x4x128xf32>
    %24 = vector.extract_strided_slice %0 {offsets = [0, 3, 0, 0], sizes = [2, 1, 4, 128], strides = [1, 1, 1, 1]} : vector<2x8x4x128xf32> to vector<2x1x4x128xf32>
    %25 = vector.shape_cast %24 : vector<2x1x4x128xf32> to vector<2x4x128xf32>
    %26 = vector.broadcast %23 : vector<1x4x128xf32> to vector<2x4x128xf32>
    %27 = arith.mulf %26, %25 : vector<2x4x128xf32>
    %28 = arith.addf %21, %27 : vector<2x4x128xf32>
    %29 = vector.extract_strided_slice %1 {offsets = [0, 4, 0, 0], sizes = [1, 1, 4, 128], strides = [1, 1, 1, 1]} : vector<1x8x4x128xf32> to vector<1x1x4x128xf32>
    %30 = vector.shape_cast %29 : vector<1x1x4x128xf32> to vector<1x4x128xf32>
    %31 = vector.extract_strided_slice %0 {offsets = [0, 4, 0, 0], sizes = [2, 1, 4, 128], strides = [1, 1, 1, 1]} : vector<2x8x4x128xf32> to vector<2x1x4x128xf32>
    %32 = vector.shape_cast %31 : vector<2x1x4x128xf32> to vector<2x4x128xf32>
    %33 = vector.broadcast %30 : vector<1x4x128xf32> to vector<2x4x128xf32>
    %34 = arith.mulf %33, %32 : vector<2x4x128xf32>
    %35 = arith.addf %28, %34 : vector<2x4x128xf32>
    %36 = vector.extract_strided_slice %1 {offsets = [0, 5, 0, 0], sizes = [1, 1, 4, 128], strides = [1, 1, 1, 1]} : vector<1x8x4x128xf32> to vector<1x1x4x128xf32>
    %37 = vector.shape_cast %36 : vector<1x1x4x128xf32> to vector<1x4x128xf32>
    %38 = vector.extract_strided_slice %0 {offsets = [0, 5, 0, 0], sizes = [2, 1, 4, 128], strides = [1, 1, 1, 1]} : vector<2x8x4x128xf32> to vector<2x1x4x128xf32>
    %39 = vector.shape_cast %38 : vector<2x1x4x128xf32> to vector<2x4x128xf32>
    %40 = vector.broadcast %37 : vector<1x4x128xf32> to vector<2x4x128xf32>
    %41 = arith.mulf %40, %39 : vector<2x4x128xf32>
    %42 = arith.addf %35, %41 : vector<2x4x128xf32>
    %43 = vector.extract_strided_slice %1 {offsets = [0, 6, 0, 0], sizes = [1, 1, 4, 128], strides = [1, 1, 1, 1]} : vector<1x8x4x128xf32> to vector<1x1x4x128xf32>
    %44 = vector.shape_cast %43 : vector<1x1x4x128xf32> to vector<1x4x128xf32>
    %45 = vector.extract_strided_slice %0 {offsets = [0, 6, 0, 0], sizes = [2, 1, 4, 128], strides = [1, 1, 1, 1]} : vector<2x8x4x128xf32> to vector<2x1x4x128xf32>
    %46 = vector.shape_cast %45 : vector<2x1x4x128xf32> to vector<2x4x128xf32>
    %47 = vector.broadcast %44 : vector<1x4x128xf32> to vector<2x4x128xf32>
    %48 = arith.mulf %47, %46 : vector<2x4x128xf32>
    %49 = arith.addf %42, %48 : vector<2x4x128xf32>
    %50 = vector.extract_strided_slice %1 {offsets = [0, 7, 0, 0], sizes = [1, 1, 4, 128], strides = [1, 1, 1, 1]} : vector<1x8x4x128xf32> to vector<1x1x4x128xf32>
    %51 = vector.shape_cast %50 : vector<1x1x4x128xf32> to vector<1x4x128xf32>
    %52 = vector.extract_strided_slice %0 {offsets = [0, 7, 0, 0], sizes = [2, 1, 4, 128], strides = [1, 1, 1, 1]} : vector<2x8x4x128xf32> to vector<2x1x4x128xf32>
    %53 = vector.shape_cast %52 : vector<2x1x4x128xf32> to vector<2x4x128xf32>
    %54 = vector.broadcast %51 : vector<1x4x128xf32> to vector<2x4x128xf32>
    %55 = arith.mulf %54, %53 : vector<2x4x128xf32>
    %56 = arith.addf %49, %55 : vector<2x4x128xf32>
    %57 = math.exp %56 : vector<2x4x128xf32>
    %c0_7 = arith.constant 0 : index
    %c0_8 = arith.constant 0 : index
    %c0_9 = arith.constant 0 : index
    %58 = vector.load %arg3[%c0_7, %c0_8, %c0_9] : memref<1x1x128xf32, #tpu.memory_space<vmem>>, vector<1x1x128xf32>
    %59 = vector.broadcast %58 : vector<1x1x128xf32> to vector<2x4x128xf32>
    %60 = arith.mulf %57, %59 : vector<2x4x128xf32>
    %cst = arith.constant dense<0.000000e+00> : vector<2x4xf32>
    %61 = vector.multi_reduction <add>, %60, %cst [2] : vector<2x4x128xf32> to vector<2x4xf32>
    %c0_10 = arith.constant 0 : index
    %c0_11 = arith.constant 0 : index
    %62 = vector.load %arg4[%c0_10, %c0_11] : memref<1x4xf32, #tpu.memory_space<vmem>>, vector<1x4xf32>
    %63 = vector.broadcast %62 : vector<1x4xf32> to vector<2x4xf32>
    %64 = arith.mulf %61, %63 : vector<2x4xf32>
    %c0_12 = arith.constant 0 : index
    %c0_13 = arith.constant 0 : index
    %65 = vector.load %arg5[%c0_12, %c0_13] : memref<2x4xf32, #tpu.memory_space<vmem>>, vector<2x4xf32>
    tpu.vector_store %arg5[%c0_12, %c0_13], %64 {strides = array<i32>} : memref<2x4xf32, #tpu.memory_space<vmem>>, vector<2x4xf32>,
    return
  }
  func.func @transform_0(%arg0: i32) -> (i32, i32, i32, i32) {
    %c0_i32 = arith.constant 0 : i32
    %c0_i32_0 = arith.constant 0 : i32
    %c0_i32_1 = arith.constant 0 : i32
    %c0_i32_2 = arith.constant 0 : i32
    return %arg0, %c0_i32, %c0_i32_0, %c0_i32_1 : i32, i32, i32, i32
  }
  func.func @transform_1(%arg0: i32) -> (i32, i32, i32, i32) {
    %c0_i32 = arith.constant 0 : i32
    %c0_i32_0 = arith.constant 0 : i32
    %c0_i32_1 = arith.constant 0 : i32
    %c0_i32_2 = arith.constant 0 : i32
    %c0_i32_3 = arith.constant 0 : i32
    return %c0_i32, %c0_i32_0, %c0_i32_1, %c0_i32_2 : i32, i32, i32, i32
  }
  func.func @transform_2(%arg0: i32) -> (i32, i32, i32) {
    %c0_i32 = arith.constant 0 : i32
    %c0_i32_0 = arith.constant 0 : i32
    %c0_i32_1 = arith.constant 0 : i32
    %c0_i32_2 = arith.constant 0 : i32
    return %c0_i32, %c0_i32_0, %c0_i32_1 : i32, i32, i32
  }
  func.func @transform_3(%arg0: i32) -> (i32, i32) {
    %c0_i32 = arith.constant 0 : i32
    %c0_i32_0 = arith.constant 0 : i32
    %c0_i32_1 = arith.constant 0 : i32
    return %c0_i32, %c0_i32_0 : i32, i32
  }
  func.func @transform_4(%arg0: i32) -> (i32, i32) {
    %c0_i32 = arith.constant 0 : i32
    %c0_i32_0 = arith.constant 0 : i32
    return %arg0, %c0_i32 : i32, i32
  }
}

</mosaic_0001>

<llo_original>
// kernel: tke_spectrum.2
$region0: #{tke_spectrum.2}
  #allocation0 [shape = 'u32[]', space=smem, size = 0x4, offset = 0x4, fixed_abs, tag = 'smem constant byte address 0x4 - core index']
  #allocation1 [shape = 'u32[72,128]{1,0:T(1,128)}', space=vmem, size = 0x9000, scoped, tag = 'internal scratch']
  %s0 = inlined_call_operand.vmem [shape: f32[2,3,32,128], index: 0, kind: input, shape index: {}]
  %s1 = inlined_call_operand.vmem [shape: f32[2,32,128], index: 1, kind: output, shape index: {}]
  %s2 = sld [smem:[#allocation0]]
  $region37: #{tke_spectrum.2} parent=0
    _
  %s4 = ssub.s32 1, %s2
  %s5 = scalar_select 0, %s4, %s2
  loop: start=0, step=1, limit=4
  $region2: #{tke_spectrum.2} parent=0 // loop_pre_header
    _
  $region3: #{tke_spectrum.2} parent=0 // loop_header
    %s7 = sphi 0, %s11
    %p8 = scmp.ge.s32.totalorder %s7, 4
    %s14 = sphi 0, %s26
    %s15 = sphi 0, %s22
    %s16 = sphi 0, %s14
    %s17 = sphi 0, %s15
    %s18 = sphi 0, %s16
    %s19 = sphi 0, %s17
    %s31 = sphi 0, %s33
    %s34 = sphi 0, %s31
    %s35 = sphi 0, %s34
    %s51 = sphi 0, %s35
    %s59 = sphi 0, %s61
    %s62 = sphi 0, %s59
    %s63 = sphi 0, %s62
    %s79 = sphi 0, %s63
  $region4: #{tke_spectrum.2} parent=0 // loop_header_branch
    %10 = sbr.rel (%p8) target = $region8
  $region5: #{tke_spectrum.2} parent=0 // loop_body
    %s12 = ssub.s32 %s7, 1
    %s13 = ssub.s32 %s7, 2
    %s20 = sadd.s32 1, %s15
    %p21 = scmp.ge.s32.totalorder %s20, 1
    %s22 = scalar_select %p21, 0, %s20
    %s23 = sadd.s32 1, %s14
    %s24 = scalar_select %p21, %s23, %s14
    %p25 = scmp.ge.s32.totalorder %s24, 2
    %s26 = scalar_select %p25, 0, %s24
    %s27 = ssub.s32 %s14, %s26
    %s28 = ssub.s32 %s15, %s22
    %s29 = sor.u32 %s27, %s28
    %p30 = scmp.eq.s32.totalorder %s29, 0
    %s32 = sadd.s32 %s31, 1
    %s33 = scalar_select %p30, %s31, %s32
    %p36 = pneg %p30
    %p37 = scmp.eq.s32.totalorder %s7, 1
    %p38 = por %p36, %p37
    %p39 = scmp.ne.s32.totalorder %s31, %s34
    %p40 = scmp.eq.s32.totalorder %s7, 0
    %p41 = por %p39, %p40
    %p42 = scmp.ne.s32.totalorder %s31, %s34
    %p43 = scmp.eq.s32.totalorder %s12, 1
    %p44 = por %p42, %p43
    %p45 = scmp.ne.s32.totalorder %s34, %s35
    %p46 = scmp.eq.s32.totalorder %s12, 0
    %p47 = por %p45, %p46
    %p48 = scmp.ne.s32.totalorder %s34, %s35
    %p49 = scmp.eq.s32.totalorder %s13, 1
    %p50 = por %p48, %p49
    %p52 = scmp.ne.s32.totalorder %s35, %s51
    %p53 = scmp.eq.s32.totalorder %s13, 0
    %p54 = por %p52, %p53
    %s55 = ssub.s32 %s14, %s26
    %s56 = ssub.s32 %s15, %s22
    %s57 = sor.u32 %s55, %s56
    %p58 = scmp.eq.s32.totalorder %s57, 0
    %s60 = sadd.s32 %s59, 1
    %s61 = scalar_select %p58, %s59, %s60
    %p64 = pneg %p58
    %p65 = scmp.eq.s32.totalorder %s7, 1
    %p66 = por %p64, %p65
    %p67 = scmp.ne.s32.totalorder %s59, %s62
    %p68 = scmp.eq.s32.totalorder %s7, 0
    %p69 = por %p67, %p68
    %p70 = scmp.ne.s32.totalorder %s59, %s62
    %p71 = scmp.eq.s32.totalorder %s12, 1
    %p72 = por %p70, %p71
    %p73 = scmp.ne.s32.totalorder %s62, %s63
    %p74 = scmp.eq.s32.totalorder %s12, 0
    %p75 = por %p73, %p74
    %p76 = scmp.ne.s32.totalorder %s62, %s63
    %p77 = scmp.eq.s32.totalorder %s13, 1
    %p78 = por %p76, %p77
    %p80 = scmp.ne.s32.totalorder %s63, %s79
    %p81 = scmp.eq.s32.totalorder %s13, 0
    %p82 = por %p80, %p81
    %p83 = scmp.le.s32.totalorder 1, %s7
    %p84 = scmp.lt.s32.totalorder %s7, 3
    %p85 = pnand %p83, %p84
    %p86 = pneg %p85
    // Predicated region
    $region9: #{tke_spectrum.2} parent=5 // pred_check
      _
    $region10: #{tke_spectrum.2} parent=5 // pred_check_branch
      %88 = sbr.rel (%p85) target = $region12
    $region11: #{tke_spectrum.2} parent=5 // pred_region
      %s89 = ssub.s32 %s7, 1
    $region12: #{tke_spectrum.2} parent=5 // pred_fallthru
      _
    %p90 = scmp.lt.s32.totalorder %s7, 2
    // Predicated region
    $region13: #{tke_spectrum.2} parent=5 // pred_check
      %p91 = pneg %p90
    $region14: #{tke_spectrum.2} parent=5 // pred_check_branch
      %93 = sbr.rel (%p91) target = $region16
    $region15: #{tke_spectrum.2} parent=5 // pred_region
      // Predicated region
      $region17: #{tke_spectrum.2} parent=15 // pred_check
        %p94 = pneg %p41
      $region18: #{tke_spectrum.2} parent=15 // pred_check_branch
        %96 = sbr.rel (%p94) target = $region20
      $region19: #{tke_spectrum.2} parent=15 // pred_region
        %s97 = smul.u32 4, %s15
        %p98 = scmp.lt.s32.totalorder %s14, 1
        %s99 = scalar_select %p98, %s14, 1
        %p100 = scmp.lt.s32.totalorder %s97, 3
        %s101 = scalar_select %p100, %s97, 3
        %s102 = smul.addr %s99, 12
        %s103 = sadd.s32 %s101, %s102
        %s104 = smul.addr %s103, 8
        %s105 = scalar_lea.vmem %s0, %s104
        %s106 = smul.u32 4, %s15
      $region20: #{tke_spectrum.2} parent=15 // pred_fallthru
        _
    $region16: #{tke_spectrum.2} parent=5 // pred_fallthru
      _
    %p107 = scmp.le.s32.totalorder 1, %s7
    %p108 = scmp.lt.s32.totalorder %s7, 3
    %p109 = pnand %p107, %p108
    %p110 = pneg %p109
    // Predicated region
    $region21: #{tke_spectrum.2} parent=5 // pred_check
      _
    $region22: #{tke_spectrum.2} parent=5 // pred_check_branch
      %112 = sbr.rel (%p109) target = $region24
    $region23: #{tke_spectrum.2} parent=5 // pred_region
      %s113 = ssub.s32 %s7, 1
      %s114 = smul.u32 4, %s17
      %p115 = scmp.lt.s32.totalorder %s16, 1
      %s116 = scalar_select %p115, %s16, 1
      %p117 = scmp.lt.s32.totalorder %s114, 3
      %s118 = scalar_select %p117, %s114, 3
      %s119 = smul.addr %s116, 12
      %s120 = sadd.s32 %s118, %s119
      %s121 = smul.addr %s120, 8
      %s122 = scalar_lea.vmem %s0, %s121
      %p123 = pneg %p47
      %p124 = pneg %p44
      %p125 = pneg %p75
      %p126 = pneg %p72
      %s127 = smul.u32 4, %s17
      %p128 = scmp.lt.s32.totalorder %s16, 1
      %s129 = scalar_select %p128, %s16, 1
      %p130 = scmp.lt.s32.totalorder %s127, 3
      %s131 = scalar_select %p130, %s127, 3
      %s132 = smul.addr %s129, 4
      %s133 = sadd.s32 %s131, %s132
      %s134 = smul.addr %s133, 8
      %s135 = scalar_lea.vmem %s1, %s134
      %s136 = smul.u32 4, %s17
      %p137 = scmp.lt.s32.totalorder %s16, 1
      %s138 = scalar_select %p137, %s16, 1
      %p139 = scmp.lt.s32.totalorder %s136, 3
      %s140 = scalar_select %p139, %s136, 3
      %s141 = smul.addr %s138, 12
      %s142 = sadd.s32 %s140, %s141
      %s143 = smul.addr %s142, 8
      %s144 = scalar_lea.vmem %s0, %s143
      %s145 = smul.u32 4, %s17
      %s146 = smul.u32 4, %s17
      %p147 = scmp.lt.s32.totalorder %s16, 1
      %s148 = scalar_select %p147, %s16, 1
      %p149 = scmp.lt.s32.totalorder %s146, 3
      %s150 = scalar_select %p149, %s146, 3
      %s151 = smul.addr %s148, 4
      %s152 = sadd.s32 %s150, %s151
      %s153 = smul.addr %s152, 8
      %s154 = scalar_lea.vmem %s1, %s153
      %s155 = smul.u32 4, %s17
      %v156 = vld [vmem:[%s144] sm:$0xff]
      %v157 = vld [vmem:[%s144 + $0x8] sm:$0xff]
      %v158 = vld [vmem:[%s144 + $0x10] sm:$0xff]
      %v159 = vld [vmem:[%s144 + $0x18] sm:$0xff]
      %v160 = vld [vmem:[%s144 + $0x20] sm:$0xff]
      %v161 = vld [vmem:[%s144 + $0x28] sm:$0xff]
      %v162 = vld [vmem:[%s144 + $0x30] sm:$0xff]
      %v163 = vld [vmem:[%s144 + $0x38] sm:$0xff]
      %v164 = vld [vmem:[%s144 + $0x40] sm:$0xff]
      %v165 = vld [vmem:[%s144 + $0x48] sm:$0xff]
      %v166 = vld [vmem:[%s144 + $0x50] sm:$0xff]
      %v167 = vld [vmem:[%s144 + $0x58] sm:$0xff]
      %v168 = vmul.f32 %v156, %v156
      %v169 = vmul.f32 %v157, %v157
      %v170 = vmul.f32 %v158, %v158
      %v171 = vmul.f32 %v159, %v159
      %v172 = vmul.f32 %v160, %v160
      %v173 = vmul.f32 %v161, %v161
      %v174 = vmul.f32 %v162, %v162
      %v175 = vmul.f32 %v163, %v163
      %v176 = vadd.f32 %v168, %v172
      %v177 = vadd.f32 %v169, %v173
      %v178 = vadd.f32 %v170, %v174
      %v179 = vadd.f32 %v171, %v175
      %v180 = vmul.f32 %v164, %v164
      %v181 = vmul.f32 %v165, %v165
      %v182 = vmul.f32 %v166, %v166
      %v183 = vmul.f32 %v167, %v167
      %v184 = vadd.f32 %v176, %v180
      %v185 = vadd.f32 %v177, %v181
      %v186 = vadd.f32 %v178, %v182
      %v187 = vadd.f32 %v179, %v183
      %v188 = vmul.f32 %v184, 0.5
      %v189 = vmul.f32 %v185, 0.5
      %v190 = vmul.f32 %v186, 0.5
      %v191 = vmul.f32 %v187, 0.5
      %192 = vst [vmem:[%s154] sm:$0xff] %v188
      %193 = vst [vmem:[%s154 + $0x8] sm:$0xff] %v189
      %194 = vst [vmem:[%s154 + $0x10] sm:$0xff] %v190
      %195 = vst [vmem:[%s154 + $0x18] sm:$0xff] %v191
      %s196 = smul.u32 4, %s17
      %p197 = scmp.lt.s32.totalorder %s16, 1
      %s198 = scalar_select %p197, %s16, 1
      %p199 = scmp.lt.s32.totalorder %s196, 3
      %s200 = scalar_select %p199, %s196, 3
      %s201 = smul.addr %s198, 4
      %s202 = sadd.s32 %s200, %s201
      %s203 = smul.addr %s202, 8
      %s204 = scalar_lea.vmem %s1, %s203
      // Predicated region
      $region25: #{tke_spectrum.2} parent=23 // pred_check
        %p205 = pneg %p72
      $region26: #{tke_spectrum.2} parent=23 // pred_check_branch
        %207 = sbr.rel (%p205) target = $region28
      $region27: #{tke_spectrum.2} parent=23 // pred_region
        %s208 = smul.u32 4, %s17
      $region28: #{tke_spectrum.2} parent=23 // pred_fallthru
        _
    $region24: #{tke_spectrum.2} parent=5 // pred_fallthru
      _
    %p209 = scmp.le.s32.totalorder 2, %s7
    // Predicated region
    $region29: #{tke_spectrum.2} parent=5 // pred_check
      %p210 = pneg %p209
    $region30: #{tke_spectrum.2} parent=5 // pred_check_branch
      %212 = sbr.rel (%p210) target = $region32
    $region31: #{tke_spectrum.2} parent=5 // pred_region
      %s213 = ssub.s32 %s7, 2
      // Predicated region
      $region33: #{tke_spectrum.2} parent=31 // pred_check
        %p214 = pneg %p78
      $region34: #{tke_spectrum.2} parent=31 // pred_check_branch
        %216 = sbr.rel (%p214) target = $region36
      $region35: #{tke_spectrum.2} parent=31 // pred_region
        %s217 = smul.u32 4, %s19
        %p218 = scmp.lt.s32.totalorder %s18, 1
        %s219 = scalar_select %p218, %s18, 1
        %p220 = scmp.lt.s32.totalorder %s217, 3
        %s221 = scalar_select %p220, %s217, 3
        %s222 = smul.addr %s219, 4
        %s223 = sadd.s32 %s221, %s222
        %s224 = smul.addr %s223, 8
        %s225 = scalar_lea.vmem %s1, %s224
      $region36: #{tke_spectrum.2} parent=31 // pred_fallthru
        _
    $region32: #{tke_spectrum.2} parent=5 // pred_fallthru
      _
  $region6: #{tke_spectrum.2} parent=0 // loop_footer
    %s11 = sadd.s32 1, %s7
  $region7: #{tke_spectrum.2} parent=0 // loop_footer_branch
    %6 = sbr.rel target = $region3
  $region8: #{tke_spectrum.2} parent=0 // loop_exit
    _

// kernel: tke_spectrum.3
$region0: #{tke_spectrum.3}
  #allocation0 [shape = 'u32[]', space=smem, size = 0x4, offset = 0x4, fixed_abs, tag = 'smem constant byte address 0x4 - core index']
  #allocation1 [shape = 'u32[72,128]{1,0:T(1,128)}', space=vmem, size = 0x9000, scoped, tag = 'internal scratch']
  %s0 = inlined_call_operand.vmem [shape: f32[2,8,4,128], index: 0, kind: input, shape index: {}]
  %s1 = inlined_call_operand.vmem [shape: f32[1,8,4,128], index: 1, kind: input, shape index: {}]
  %s2 = inlined_call_operand.vmem [shape: f32[1,1,128], index: 2, kind: input, shape index: {}]
  %s3 = inlined_call_operand.vmem [shape: f32[1,4], index: 3, kind: input, shape index: {}]
  %s4 = inlined_call_operand.hbm [shape: f32[2,4], index: 4, kind: output, shape index: {}]
  %s5 = sld [smem:[#allocation0]]
  $region26: #{tke_spectrum.3} parent=0
    _
  %s7 = ssub.s32 1, %s5
  %s8 = scalar_select 0, %s7, %s5
  $region1: #{tke_spectrum.3} parent=0
    #allocation2 [shape = 'u8[1024]{0}', space=vmem, size = 0x400, scoped, tag = 'output window, operand 0, single buffered']
    #allocation3 [shape = 's32[1]{0}', space=sflag, size = 0x4, scoped, tag = 'scoped memory for tke_spectrum.3']
    %9 = vsyncpa [#allocation3], 0
    // Predicated region
    $region2: #{tke_spectrum.3} parent=1 // pred_check
      _
    $region3: #{tke_spectrum.3} parent=1 // pred_check_branch
      %11 = sbr.rel (0) target = $region5
    $region4: #{tke_spectrum.3} parent=1 // pred_region
      _
    $region5: #{tke_spectrum.3} parent=1 // pred_fallthru
      _
    // Predicated region
    $region6: #{tke_spectrum.3} parent=1 // pred_check
      _
    $region7: #{tke_spectrum.3} parent=1 // pred_check_branch
      %13 = sbr.rel (0) target = $region9
    $region8: #{tke_spectrum.3} parent=1 // pred_region
      _
    $region9: #{tke_spectrum.3} parent=1 // pred_fallthru
      _
    // Predicated region
    $region10: #{tke_spectrum.3} parent=1 // pred_check
      _
    $region11: #{tke_spectrum.3} parent=1 // pred_check_branch
      %15 = sbr.rel (0) target = $region13
    $region12: #{tke_spectrum.3} parent=1 // pred_region
      _
    $region13: #{tke_spectrum.3} parent=1 // pred_fallthru
      _
    // Predicated region
    $region14: #{tke_spectrum.3} parent=1 // pred_check
      _
    $region15: #{tke_spectrum.3} parent=1 // pred_check_branch
      %17 = sbr.rel (0) target = $region17
    $region16: #{tke_spectrum.3} parent=1 // pred_region
      _
    $region17: #{tke_spectrum.3} parent=1 // pred_fallthru
      _
    %v18 = vld [vmem:[%s0] sm:$0xf]
    %v19 = vld [vmem:[%s0 + $0x4] sm:$0xf]
    %v20 = vld [vmem:[%s0 + $0x8] sm:$0xf]
    %v21 = vld [vmem:[%s0 + $0xc] sm:$0xf]
    %v22 = vld [vmem:[%s0 + $0x10] sm:$0xf]
    %v23 = vld [vmem:[%s0 + $0x14] sm:$0xf]
    %v24 = vld [vmem:[%s0 + $0x18] sm:$0xf]
    %v25 = vld [vmem:[%s0 + $0x1c] sm:$0xf]
    %v26 = vld [vmem:[%s0 + $0x20] sm:$0xf]
    %v27 = vld [vmem:[%s0 + $0x24] sm:$0xf]
    %v28 = vld [vmem:[%s0 + $0x28] sm:$0xf]
    %v29 = vld [vmem:[%s0 + $0x2c] sm:$0xf]
    %v30 = vld [vmem:[%s0 + $0x30] sm:$0xf]
    %v31 = vld [vmem:[%s0 + $0x34] sm:$0xf]
    %v32 = vld [vmem:[%s0 + $0x38] sm:$0xf]
    %v33 = vld [vmem:[%s0 + $0x3c] sm:$0xf]
    %v34 = vld [vmem:[%s1] sm:$0xf]
    %v35 = vld [vmem:[%s1 + $0x4] sm:$0xf]
    %v36 = vld [vmem:[%s1 + $0x8] sm:$0xf]
    %v37 = vld [vmem:[%s1 + $0xc] sm:$0xf]
    %v38 = vld [vmem:[%s1 + $0x10] sm:$0xf]
    %v39 = vld [vmem:[%s1 + $0x14] sm:$0xf]
    %v40 = vld [vmem:[%s1 + $0x18] sm:$0xf]
    %v41 = vld [vmem:[%s1 + $0x1c] sm:$0xf]
    %v42 = vmul.f32 %v34, %v18
    %v43 = vmul.f32 %v34, %v26
    %v44 = vmul.f32 %v35, %v19
    %v45 = vmul.f32 %v35, %v27
    %v46 = vadd.f32 %v42, %v44
    %v47 = vadd.f32 %v43, %v45
    %v48 = vmul.f32 %v36, %v20
    %v49 = vmul.f32 %v36, %v28
    %v50 = vadd.f32 %v46, %v48
    %v51 = vadd.f32 %v47, %v49
    %v52 = vmul.f32 %v37, %v21
    %v53 = vmul.f32 %v37, %v29
    %v54 = vadd.f32 %v50, %v52
    %v55 = vadd.f32 %v51, %v53
    %v56 = vmul.f32 %v38, %v22
    %v57 = vmul.f32 %v38, %v30
    %v58 = vadd.f32 %v54, %v56
    %v59 = vadd.f32 %v55, %v57
    %v60 = vmul.f32 %v39, %v23
    %v61 = vmul.f32 %v39, %v31
    %v62 = vadd.f32 %v58, %v60
    %v63 = vadd.f32 %v59, %v61
    %v64 = vmul.f32 %v40, %v24
    %v65 = vmul.f32 %v40, %v32
    %v66 = vadd.f32 %v62, %v64
    %v67 = vadd.f32 %v63, %v65
    %v68 = vmul.f32 %v41, %v25
    %v69 = vmul.f32 %v41, %v33
    %v70 = vadd.f32 %v66, %v68
    %v71 = vadd.f32 %v67, %v69
    %v72 = vmul.f32 %v70, 1.442695
    %v73 = vpow.pop %v72
    %v74 = vmul.f32 %v71, 1.442695
    %v75 = vpow.pop %v74
    %v76 = vld [vmem:[%s2] sm:$0x1]
    %v78 = vperm.slane %v76, 0
    %v80 = vmul.f32 %v73, %v78
    %v81 = vmul.f32 %v75, %v78
    %vm82 = vcmask 1043456
    %v83 = vsel %vm82, %v80, 0.0
    %84 = vadd.xlane.f32.xlu0 %v83
    %v85 = vpop.xlane.xlu0 %84
    %v86 = vsel %vm82, %v81, 0.0
    %87 = vadd.xlane.f32.xlu0 %v86
    %v88 = vpop.xlane.xlu0 %87
    %v89 = vld [vmem:[%s3] sm:$0x1]
    %v91 = vperm.slane %v89, 0
    %v92 = vlaneseq
    %v93 = vshrl.u32 %v92, 7
    %95 = vset.pattern.permute.xlu0 %v93
    %96 = vperm.xlu0 %95, %v91
    %v97 = vpop.permute.xlu0 %96
    %v99 = vmul.f32 %v85, %v97
    %v100 = vmul.f32 %v88, %v97
    %103 = vset.pattern.permute.xlu0 0
    %104 = vperm.xlu0 %103, %v99
    %v105 = vpop.permute.xlu0 %104
    %106 = vset.pattern.permute.xlu0 0
    %107 = vperm.xlu0 %106, %v100
    %v108 = vpop.permute.xlu0 %107
    %v109 = vlaneseq
    %v110 = vand.u32 %v109, 127
    %v111 = vperm.slane %v105, %v110
    %v112 = vperm.slane %v108, %v110
    %vm113 = vcmask 1041409
    %v114 = vsel %vm113, %v112, %v111
    %vm116 = vcmask 25600
    %117 = vst.msk [vmem:[#allocation2] sm:$0x3] %vm116, %v114
    // Predicated region
    $region18: #{tke_spectrum.3} parent=1 // pred_check
      _
    $region19: #{tke_spectrum.3} parent=1 // pred_check_branch
      %119 = sbr.rel (0) target = $region21
    $region20: #{tke_spectrum.3} parent=1 // pred_region
      %121 = vsyncadd [#allocation3], 0
      %s123 = sshll.u32 [#allocation2], 4
      %s124 = int_to_ptr.vmem [resolvable:$true] %s123
      %s125 = sshll.u32 %s4, 4
      %s126 = int_to_ptr.hbm [resolvable:$true] %s125
      %128 = dma.vmem_to_hbm [thread:$0]  %s124, 32, %s126, [#allocation3]
    $region21: #{tke_spectrum.3} parent=1 // pred_fallthru
      _
    // Predicated region
    $region22: #{tke_spectrum.3} parent=1 // pred_check
      _
    $region23: #{tke_spectrum.3} parent=1 // pred_check_branch
      %130 = sbr.rel (0) target = $region25
    $region24: #{tke_spectrum.3} parent=1 // pred_region
      %132 = dma.done [#allocation3], 32
    $region25: #{tke_spectrum.3} parent=1 // pred_fallthru
      _
    %133 = vsyncpa [#allocation3], 1

</llo_original>
